<compile_context>
chip_gen: v7x
topology: tpu7x:2x2x1
jax: 0.10.0
libtpu: 0.0.40
codegen_flags: <defaults>
</compile_context>

<pallas_src>
import math

import jax
import jax.numpy as jnp
from jax.experimental import pallas as pl
from jax.experimental.pallas import tpu as pltpu


# ----------------------------------------------------------------------------
# Pallas kernel: one invocation, whole batch
# ----------------------------------------------------------------------------
def _diffusion_embedding_kernel(steps_ref,        # (B, 1)  int32
                                emb_ref,          # (T, E)  full embedding table
                                w1_ref, b1_ref,   # (E, P), (1, P)
                                w2_ref, b2_ref,   # (P, P), (1, P)
                                out_ref):         # (B, P)
    B = steps_ref.shape[0]
    T = emb_ref.shape[0]

    # In-kernel gather as a one-hot matmul: (B, T) @ (T, E) -> (B, E).
    steps = steps_ref[...]                                            # (B, 1) int32
    iota = jax.lax.broadcasted_iota(jnp.int32, (B, T), 1)             # (B, T)
    onehot = (iota == steps).astype(jnp.float32)                      # (B, T)
    x = jnp.dot(onehot, emb_ref[...],
                preferred_element_type=jnp.float32)                   # (B, E)

    # projection1 + SiLU
    h = jnp.dot(x, w1_ref[...], preferred_element_type=jnp.float32)   # (B, P)
    h = h + b1_ref[...]
    h = h * jax.nn.sigmoid(h)

    # projection2 + SiLU
    y = jnp.dot(h, w2_ref[...], preferred_element_type=jnp.float32)   # (B, P)
    y = y + b2_ref[...]
    y = y * jax.nn.sigmoid(y)

    out_ref[...] = y.astype(out_ref.dtype)


def diffusion_embedding_forward(diffusion_step, embedding, w1, b1, w2, b2):
    """diffusion_step: int (B,) ; returns (B, projection_dim) float32."""
    B = diffusion_step.shape[0]
    P = w1.shape[1]

    steps_2d = diffusion_step.astype(jnp.int32).reshape(B, 1)

    vmem = pl.BlockSpec(memory_space=pltpu.MemorySpace.VMEM)

    return pl.pallas_call(
        _diffusion_embedding_kernel,
        out_shape=jax.ShapeDtypeStruct((B, P), jnp.float32),
        in_specs=[vmem, vmem, vmem, vmem, vmem, vmem],
        out_specs=pl.BlockSpec(memory_space=pltpu.MemorySpace.VMEM),
    )(steps_2d, embedding, w1, b1, w2, b2)


# ----------------------------------------------------------------------------
# Parameter / buffer construction (deterministic, mirrors nn.Module __init__)
# ----------------------------------------------------------------------------
def build_embedding_table(num_steps, half_dim):
    steps = jnp.arange(num_steps, dtype=jnp.float32)[:, None]                 # (T, 1)
    freqs = 10.0 ** (jnp.arange(half_dim, dtype=jnp.float32)
                     / (half_dim - 1) * 4.0)[None, :]                          # (1, d)
    table = steps * freqs                                                      # (T, d)
    return jnp.concatenate([jnp.sin(table), jnp.cos(table)], axis=1)           # (T, 2d)


def init_linear(key, in_features, out_features):
    # PyTorch nn.Linear default init: U(-1/sqrt(in), 1/sqrt(in))
    kw, kb = jax.random.split(key)
    bound = 1.0 / math.sqrt(in_features)
    # store weight already transposed to (in, out) for x @ W
    w = jax.random.uniform(kw, (in_features, out_features), jnp.float32,
                           minval=-bound, maxval=bound)
    b = jax.random.uniform(kb, (1, out_features), jnp.float32,
                           minval=-bound, maxval=bound)
    return w, b


def reference_forward(diffusion_step, embedding, w1, b1, w2, b2):
    x = embedding[diffusion_step]
    x = x @ w1 + b1
    x = x * jax.nn.sigmoid(x)
    x = x @ w2 + b2
    x = x * jax.nn.sigmoid(x)
    return x


if __name__ == "__main__":
    num_steps = 50
    embedding_dim = 128
    projection_dim = 128
    batch = 8

    key = jax.random.PRNGKey(0)
    k1, k2, k3 = jax.random.split(key, 3)

    embedding = build_embedding_table(num_steps, embedding_dim // 2)   # (50, 128)
    w1, b1 = init_linear(k1, embedding_dim, projection_dim)
    w2, b2 = init_linear(k2, projection_dim, projection_dim)

    diffusion_step = jax.random.randint(k3, (batch,), 0, num_steps, dtype=jnp.int32)

    out = diffusion_embedding_forward(diffusion_step, embedding, w1, b1, w2, b2)
    out = jax.block_until_ready(out)

    ref = reference_forward(diffusion_step, embedding, w1, b1, w2, b2)
    assert out.shape == (batch, projection_dim)
    assert jnp.allclose(out, ref, atol=1e-5, rtol=1e-5), "mismatch vs reference"

    print("KERNEL_OK")
</pallas_src>

<mosaic_0001>
module attributes {stable_mosaic.version = 11 : i64} {
  func.func @_diffusion_embedding_kernel(%arg0: memref<8x1xi32, #tpu.memory_space<vmem>>, %arg1: memref<50x128xf32, #tpu.memory_space<vmem>>, %arg2: memref<128x128xf32, #tpu.memory_space<vmem>>, %arg3: memref<1x128xf32, #tpu.memory_space<vmem>>, %arg4: memref<128x128xf32, #tpu.memory_space<vmem>>, %arg5: memref<1x128xf32, #tpu.memory_space<vmem>>, %arg6: memref<8x128xf32, #tpu.memory_space<vmem>>) attributes {dimension_semantics = [], scalar_prefetch = 0 : i64, scratch_operands = 0 : i64, tpu.core_type = #tpu.core_type<tc>} {
    %c0 = arith.constant 0 : index
    %c0_0 = arith.constant 0 : index
    %0 = vector.load %arg0[%c0, %c0_0] : memref<8x1xi32, #tpu.memory_space<vmem>>, vector<8x1xi32>
    %1 = tpu.iota {dimensions = array<i32: 1>} : vector<8x50xi32>
    %2 = vector.broadcast %0 : vector<8x1xi32> to vector<8x50xi32>
    %3 = arith.cmpi eq, %1, %2 : vector<8x50xi32>
    %4 = arith.extui %3 : vector<8x50xi1> to vector<8x50xi32>
    %5 = arith.sitofp %4 : vector<8x50xi32> to vector<8x50xf32>
    %c0_1 = arith.constant 0 : index
    %c0_2 = arith.constant 0 : index
    %6 = vector.load %arg1[%c0_1, %c0_2] : memref<50x128xf32, #tpu.memory_space<vmem>>, vector<50x128xf32>
    %cst = arith.constant dense<0.000000e+00> : vector<8x128xf32>
    %7 = tpu.matmul %5, %6, %cst {dimension_numbers = #tpu.dot_dimension_numbers<[1], [0], [0], [1], [0, 0, 1, 1], [], []>} : vector<8x50xf32>, vector<50x128xf32>, vector<8x128xf32> -> vector<8x128xf32>
    %c0_3 = arith.constant 0 : index
    %c0_4 = arith.constant 0 : index
    %8 = vector.load %arg2[%c0_3, %c0_4] : memref<128x128xf32, #tpu.memory_space<vmem>>, vector<128x128xf32>
    %cst_5 = arith.constant dense<0.000000e+00> : vector<8x128xf32>
    %9 = tpu.matmul %7, %8, %cst_5 {dimension_numbers = #tpu.dot_dimension_numbers<[1], [0], [0], [1], [0, 0, 1, 1], [], []>} : vector<8x128xf32>, vector<128x128xf32>, vector<8x128xf32> -> vector<8x128xf32>
    %c0_6 = arith.constant 0 : index
    %c0_7 = arith.constant 0 : index
    %10 = vector.load %arg3[%c0_6, %c0_7] : memref<1x128xf32, #tpu.memory_space<vmem>>, vector<1x128xf32>
    %11 = vector.broadcast %10 : vector<1x128xf32> to vector<8x128xf32>
    %12 = arith.addf %9, %11 : vector<8x128xf32>
    %13 = arith.negf %12 : vector<8x128xf32>
    %14 = math.exp %13 : vector<8x128xf32>
    %cst_8 = arith.constant 1.000000e+00 : f32
    %15 = vector.broadcast %cst_8 : f32 to vector<8x128xf32>
    %16 = arith.addf %15, %14 : vector<8x128xf32>
    %17 = arith.divf %15, %16 : vector<8x128xf32>
    %18 = arith.mulf %12, %17 : vector<8x128xf32>
    %c0_9 = arith.constant 0 : index
    %c0_10 = arith.constant 0 : index
    %19 = vector.load %arg4[%c0_9, %c0_10] : memref<128x128xf32, #tpu.memory_space<vmem>>, vector<128x128xf32>
    %cst_11 = arith.constant dense<0.000000e+00> : vector<8x128xf32>
    %20 = tpu.matmul %18, %19, %cst_11 {dimension_numbers = #tpu.dot_dimension_numbers<[1], [0], [0], [1], [0, 0, 1, 1], [], []>} : vector<8x128xf32>, vector<128x128xf32>, vector<8x128xf32> -> vector<8x128xf32>
    %c0_12 = arith.constant 0 : index
    %c0_13 = arith.constant 0 : index
    %21 = vector.load %arg5[%c0_12, %c0_13] : memref<1x128xf32, #tpu.memory_space<vmem>>, vector<1x128xf32>
    %22 = vector.broadcast %21 : vector<1x128xf32> to vector<8x128xf32>
    %23 = arith.addf %20, %22 : vector<8x128xf32>
    %24 = arith.negf %23 : vector<8x128xf32>
    %25 = math.exp %24 : vector<8x128xf32>
    %cst_14 = arith.constant 1.000000e+00 : f32
    %26 = vector.broadcast %cst_14 : f32 to vector<8x128xf32>
    %27 = arith.addf %26, %25 : vector<8x128xf32>
    %28 = arith.divf %26, %27 : vector<8x128xf32>
    %29 = arith.mulf %23, %28 : vector<8x128xf32>
    %c0_15 = arith.constant 0 : index
    %c0_16 = arith.constant 0 : index
    %30 = vector.load %arg6[%c0_15, %c0_16] : memref<8x128xf32, #tpu.memory_space<vmem>>, vector<8x128xf32>
    tpu.vector_store %arg6[%c0_15, %c0_16], %29 {strides = array<i32>} : memref<8x128xf32, #tpu.memory_space<vmem>>, vector<8x128xf32>,
    return
  }
}

</mosaic_0001>

<llo_original>
// kernel: tpu_custom_call.1
$region0: #{tpu_custom_call.1}
  #allocation0 [shape = 'u32[]', space=smem, size = 0x4, offset = 0x4, fixed_abs, tag = 'smem constant byte address 0x4 - core index']
  #allocation1 [shape = 'u32[144,128]{1,0:T(1,128)}', space=vmem, size = 0x12000, scoped, tag = 'internal scratch']
  %s0 = inlined_call_operand.vmem [shape: s32[8,1], index: 0, kind: input, shape index: {}]
  %s1 = inlined_call_operand.hbm [shape: f32[50,128], index: 1, kind: input, shape index: {}]
  %s2 = inlined_call_operand.hbm [shape: f32[128,128], index: 2, kind: input, shape index: {}]
  %s3 = inlined_call_operand.vmem [shape: f32[1,128], index: 3, kind: input, shape index: {}]
  %s4 = inlined_call_operand.hbm [shape: f32[128,128], index: 4, kind: input, shape index: {}]
  %s5 = inlined_call_operand.vmem [shape: f32[1,128], index: 5, kind: input, shape index: {}]
  %s6 = inlined_call_operand.hbm [shape: f32[8,128], index: 6, kind: output, shape index: {}]
  %s7 = sld [smem:[#allocation0]]
  $region46: #{tpu_custom_call.1} parent=0
    _
  %s9 = ssub.s32 1, %s7
  %s10 = scalar_select 0, %s9, %s7
  $region1: #{tpu_custom_call.1} parent=0
    #allocation2 [shape = 'u8[28672]{0}', space=vmem, size = 0x7000, scoped, tag = 'input window, operand 1, single buffered']
    #allocation3 [shape = 's32[1]{0}', space=sflag, size = 0x4, scoped, tag = 'scoped memory for tpu_custom_call.1']
    #allocation4 [shape = 's32[1]{0}', space=sflag, size = 0x4, scoped, tag = 'scoped memory for tpu_custom_call.1']
    #allocation5 [shape = 'u8[65536]{0}', space=vmem, size = 0x10000, scoped, tag = 'input window, operand 2, single buffered']
    #allocation6 [shape = 's32[1]{0}', space=sflag, size = 0x4, scoped, tag = 'scoped memory for tpu_custom_call.1']
    #allocation7 [shape = 'u8[65536]{0}', space=vmem, size = 0x10000, scoped, tag = 'input window, operand 4, single buffered']
    #allocation8 [shape = 'u8[4096]{0}', space=vmem, size = 0x1000, scoped, tag = 'output window, operand 0, single buffered']
    %11 = vsyncpa [#allocation3], 0
    %12 = vsyncpa [#allocation6], 0
    %13 = vsyncpa [#allocation4], 0
    // Predicated region
    $region2: #{tpu_custom_call.1} parent=1 // pred_check
      _
    $region3: #{tpu_custom_call.1} parent=1 // pred_check_branch
      %15 = sbr.rel (0) target = $region5
    $region4: #{tpu_custom_call.1} parent=1 // pred_region
      _
    $region5: #{tpu_custom_call.1} parent=1 // pred_fallthru
      _
    // Predicated region
    $region6: #{tpu_custom_call.1} parent=1 // pred_check
      _
    $region7: #{tpu_custom_call.1} parent=1 // pred_check_branch
      %17 = sbr.rel (0) target = $region9
    $region8: #{tpu_custom_call.1} parent=1 // pred_region
      %s19 = ssub.s32 896, 896
      %20 = vsyncadd [#allocation3], %s19
      %s21 = sshll.u32 [#allocation2], 4
      %s22 = int_to_ptr.vmem [resolvable:$true] %s21
      %27 = dma.hbm_to_vmem [thread:$0]  %s1, 896, %s22, [#allocation3], 128, 128, 8
    $region9: #{tpu_custom_call.1} parent=1 // pred_fallthru
      _
    // Predicated region
    $region10: #{tpu_custom_call.1} parent=1 // pred_check
      _
    $region11: #{tpu_custom_call.1} parent=1 // pred_check_branch
      %29 = sbr.rel (0) target = $region13
    $region12: #{tpu_custom_call.1} parent=1 // pred_region
      %s31 = ssub.s32 2048, 2048
      %32 = vsyncadd [#allocation6], %s31
      %s33 = sshll.u32 [#allocation5], 4
      %s34 = int_to_ptr.vmem [resolvable:$true] %s33
      %39 = dma.hbm_to_vmem [thread:$0]  %s2, 2048, %s34, [#allocation6], 128, 128, 8
    $region13: #{tpu_custom_call.1} parent=1 // pred_fallthru
      _
    // Predicated region
    $region14: #{tpu_custom_call.1} parent=1 // pred_check
      _
    $region15: #{tpu_custom_call.1} parent=1 // pred_check_branch
      %41 = sbr.rel (0) target = $region17
    $region16: #{tpu_custom_call.1} parent=1 // pred_region
      _
    $region17: #{tpu_custom_call.1} parent=1 // pred_fallthru
      _
    // Predicated region
    $region18: #{tpu_custom_call.1} parent=1 // pred_check
      _
    $region19: #{tpu_custom_call.1} parent=1 // pred_check_branch
      %43 = sbr.rel (0) target = $region21
    $region20: #{tpu_custom_call.1} parent=1 // pred_region
      %s45 = ssub.s32 2048, 2048
      %46 = vsyncadd [#allocation6], %s45
      %s47 = sshll.u32 [#allocation7], 4
      %s48 = int_to_ptr.vmem [resolvable:$true] %s47
      %53 = dma.hbm_to_vmem [thread:$0]  %s4, 2048, %s48, [#allocation6], 128, 128, 8
    $region21: #{tpu_custom_call.1} parent=1 // pred_fallthru
      _
    // Predicated region
    $region22: #{tpu_custom_call.1} parent=1 // pred_check
      _
    $region23: #{tpu_custom_call.1} parent=1 // pred_check_branch
      %55 = sbr.rel (0) target = $region25
    $region24: #{tpu_custom_call.1} parent=1 // pred_region
      _
    $region25: #{tpu_custom_call.1} parent=1 // pred_fallthru
      _
    // Predicated region
    $region26: #{tpu_custom_call.1} parent=1 // pred_check
      _
    $region27: #{tpu_custom_call.1} parent=1 // pred_check_branch
      %57 = sbr.rel (0) target = $region29
    $region28: #{tpu_custom_call.1} parent=1 // pred_region
      %58 = dma.done [#allocation3], 896
    $region29: #{tpu_custom_call.1} parent=1 // pred_fallthru
      _
    // Predicated region
    $region30: #{tpu_custom_call.1} parent=1 // pred_check
      _
    $region31: #{tpu_custom_call.1} parent=1 // pred_check_branch
      %60 = sbr.rel (0) target = $region33
    $region32: #{tpu_custom_call.1} parent=1 // pred_region
      %61 = dma.done [#allocation6], 2048
    $region33: #{tpu_custom_call.1} parent=1 // pred_fallthru
      _
    // Predicated region
    $region34: #{tpu_custom_call.1} parent=1 // pred_check
      _
    $region35: #{tpu_custom_call.1} parent=1 // pred_check_branch
      %63 = sbr.rel (0) target = $region37
    $region36: #{tpu_custom_call.1} parent=1 // pred_region
      %64 = dma.done [#allocation6], 2048
    $region37: #{tpu_custom_call.1} parent=1 // pred_fallthru
      _
    %v65 = vld [vmem:[%s0] sm:$0xff]
    %v66 = vlaneseq
    %v67 = vand.u32 %v66, 127
    %68 = vset.pattern.permute.xlu0 0
    %69 = vperm.xlu0 %68, %v65
    %v70 = vpop.permute.xlu0 %69
    %vm71 = vcmp.eq.s32.totalorder %v67, %v70
    %v72 = vsel %vm71, 1, 0
    %v73 = vcvt.s32.f32 %v72
    %v74 = vld [vmem:[#allocation2] sm:$0xff]
    %v75 = vld [vmem:[#allocation2 + $0x8] sm:$0xff]
    %v76 = vld [vmem:[#allocation2 + $0x10] sm:$0xff]
    %v77 = vld [vmem:[#allocation2 + $0x18] sm:$0xff]
    %v78 = vld [vmem:[#allocation2 + $0x20] sm:$0xff]
    %v79 = vld [vmem:[#allocation2 + $0x28] sm:$0xff]
    %v80 = vld [vmem:[#allocation2 + $0x30] sm:$0x3]
    %vm81 = vcmask 408576
    %v83 = vsel %vm81, %v73, 0
    %vm85 = vcmask 1041408
    %v87 = vsel %vm85, %v80, 0
    %89 = vmatprep.subr.mxu0 0.0
    %90 = vmatpush1.msra.mxu0 %v74
    %91 = vmatprep.subr.mxu0 0.0
    %92 = vmatpush1.msra.mxu0 %v75
    %93 = vmatprep.subr.mxu0 0.0
    %94 = vmatpush1.msra.mxu0 %v76
    %95 = vmatprep.subr.mxu0 0.0
    %96 = vmatpush1.msra.mxu0 %v77
    %97 = vmatprep.subr.mxu0 0.0
    %98 = vmatpush1.msra.mxu0 %v78
    %99 = vmatprep.subr.mxu0 0.0
    %100 = vmatpush1.msra.mxu0 %v79
    %101 = vmatprep.subr.mxu0 0.0
    %102 = vmatpush1.msra.mxu0 %v87
    %103 = vmatprep.subr.mxu0 0.0
    %104 = vmatpush1.msra.mxu0 0.0
    %105 = vmatprep.subr.mxu0 0.0
    %106 = vmatpush1.msra.mxu0 0.0
    %107 = vmatprep.subr.mxu0 0.0
    %108 = vmatpush1.msra.mxu0 0.0
    %109 = vmatprep.subr.mxu0 0.0
    %110 = vmatpush1.msra.mxu0 0.0
    %111 = vmatprep.subr.mxu0 0.0
    %112 = vmatpush1.msra.mxu0 0.0
    %113 = vmatprep.subr.mxu0 0.0
    %114 = vmatpush1.msra.mxu0 0.0
    %115 = vmatprep.subr.mxu0 0.0
    %116 = vmatpush1.msra.mxu0 0.0
    %117 = vmatprep.subr.mxu0 0.0
    %118 = vmatpush1.msra.mxu0 0.0
    %119 = vmatprep.subr.mxu0 0.0
    %120 = vmatpush1.msra.mxu0 0.0
    %121 = vmatprep.subr.mxu0 0.0
    %122 = vmatpush1.msra.mxu0 0.0
    %123 = vmatprep.subr.mxu0 0.0
    %124 = vmatpush1.msra.mxu0 0.0
    %125 = vmatprep.subr.mxu0 0.0
    %126 = vmatpush1.msra.mxu0 0.0
    %127 = vmatprep.subr.mxu0 0.0
    %128 = vmatpush1.msra.mxu0 0.0
    %129 = vmatprep.subr.mxu0 0.0
    %130 = vmatpush1.msra.mxu0 0.0
    %131 = vmatprep.subr.mxu0 0.0
    %132 = vmatpush1.msra.mxu0 0.0
    %133 = vmatprep.subr.mxu0 0.0
    %134 = vmatpush1.msra.mxu0 0.0
    %135 = vmatprep.subr.mxu0 0.0
    %136 = vmatpush1.msra.mxu0 0.0
    %137 = vmatprep.subr.mxu0 0.0
    %138 = vmatpush1.msra.mxu0 0.0
    %139 = vmatprep.subr.mxu0 0.0
    %140 = vmatpush1.msra.mxu0 0.0
    %141 = vmatprep.subr.mxu0 0.0
    %142 = vmatpush1.msra.mxu0 0.0
    %143 = vmatprep.subr.mxu0 0.0
    %144 = vmatpush1.msra.mxu0 0.0
    %145 = vmatprep.subr.mxu0 0.0
    %146 = vmatpush1.msra.mxu0 0.0
    %147 = vmatprep.subr.mxu0 0.0
    %148 = vmatpush1.msra.mxu0 0.0
    %149 = vmatprep.subr.mxu0 0.0
    %150 = vmatpush1.msra.mxu0 0.0
    %151 = vmatprep.subr.mxu0 0.0
    %152 = vmatpush1.msra.mxu0 0.0
    %153 = vmatprep.mubr.f32.mxu0 0.0
    %154 = vmatmul.mubr.f32.gmra.mrb[0].mxu0 %v83
    %v155 = vpop.f32.mrb[0].mxu0
    %v156 = vadd.f32 0.0, %v155
    %v157 = vpop.f32.mrb[0].mxu0
    %158 = vdwg.mxu0
    %v159 = vld [vmem:[#allocation5] sm:$0xff]
    %v160 = vld [vmem:[#allocation5 + $0x8] sm:$0xff]
    %v161 = vld [vmem:[#allocation5 + $0x10] sm:$0xff]
    %v162 = vld [vmem:[#allocation5 + $0x18] sm:$0xff]
    %v163 = vld [vmem:[#allocation5 + $0x20] sm:$0xff]
    %v164 = vld [vmem:[#allocation5 + $0x28] sm:$0xff]
    %v165 = vld [vmem:[#allocation5 + $0x30] sm:$0xff]
    %v166 = vld [vmem:[#allocation5 + $0x38] sm:$0xff]
    %v167 = vld [vmem:[#allocation5 + $0x40] sm:$0xff]
    %v168 = vld [vmem:[#allocation5 + $0x48] sm:$0xff]
    %v169 = vld [vmem:[#allocation5 + $0x50] sm:$0xff]
    %v170 = vld [vmem:[#allocation5 + $0x58] sm:$0xff]
    %v171 = vld [vmem:[#allocation5 + $0x60] sm:$0xff]
    %v172 = vld [vmem:[#allocation5 + $0x68] sm:$0xff]
    %v173 = vld [vmem:[#allocation5 + $0x70] sm:$0xff]
    %v174 = vld [vmem:[#allocation5 + $0x78] sm:$0xff]
    %v175 = vld [vmem:[%s3] sm:$0x1]
    %v177 = vlaneseq
    %v178 = vshrl.u32 %v177, 7
    %v179 = vsub.s32 0, %v178
    %v180 = vrot.slane %v175, %v179
    %182 = vmatprep.subr.mxu0 0.0
    %183 = vmatpush1.msra.mxu0 %v159
    %184 = vmatprep.subr.mxu0 0.0
    %185 = vmatpush1.msra.mxu0 %v160
    %186 = vmatprep.subr.mxu0 0.0
    %187 = vmatpush1.msra.mxu0 %v161
    %188 = vmatprep.subr.mxu0 0.0
    %189 = vmatpush1.msra.mxu0 %v162
    %190 = vmatprep.subr.mxu0 0.0
    %191 = vmatpush1.msra.mxu0 %v163
    %192 = vmatprep.subr.mxu0 0.0
    %193 = vmatpush1.msra.mxu0 %v164
    %194 = vmatprep.subr.mxu0 0.0
    %195 = vmatpush1.msra.mxu0 %v165
    %196 = vmatprep.subr.mxu0 0.0
    %197 = vmatpush1.msra.mxu0 %v166
    %198 = vmatprep.subr.mxu0 0.0
    %199 = vmatpush1.msra.mxu0 %v167
    %200 = vmatprep.subr.mxu0 0.0
    %201 = vmatpush1.msra.mxu0 %v168
    %202 = vmatprep.subr.mxu0 0.0
    %203 = vmatpush1.msra.mxu0 %v169
    %204 = vmatprep.subr.mxu0 0.0
    %205 = vmatpush1.msra.mxu0 %v170
    %206 = vmatprep.subr.mxu0 0.0
    %207 = vmatpush1.msra.mxu0 %v171
    %208 = vmatprep.subr.mxu0 0.0
    %209 = vmatpush1.msra.mxu0 %v172
    %210 = vmatprep.subr.mxu0 0.0
    %211 = vmatpush1.msra.mxu0 %v173
    %212 = vmatprep.subr.mxu0 0.0
    %213 = vmatpush1.msra.mxu0 %v174
    %214 = vmatprep.subr.mxu0 0.0
    %215 = vmatpush1.msra.mxu0 0.0
    %216 = vmatprep.subr.mxu0 0.0
    %217 = vmatpush1.msra.mxu0 0.0
    %218 = vmatprep.subr.mxu0 0.0
    %219 = vmatpush1.msra.mxu0 0.0
    %220 = vmatprep.subr.mxu0 0.0
    %221 = vmatpush1.msra.mxu0 0.0
    %222 = vmatprep.subr.mxu0 0.0
    %223 = vmatpush1.msra.mxu0 0.0
    %224 = vmatprep.subr.mxu0 0.0
    %225 = vmatpush1.msra.mxu0 0.0
    %226 = vmatprep.subr.mxu0 0.0
    %227 = vmatpush1.msra.mxu0 0.0
    %228 = vmatprep.subr.mxu0 0.0
    %229 = vmatpush1.msra.mxu0 0.0
    %230 = vmatprep.subr.mxu0 0.0
    %231 = vmatpush1.msra.mxu0 0.0
    %232 = vmatprep.subr.mxu0 0.0
    %233 = vmatpush1.msra.mxu0 0.0
    %234 = vmatprep.subr.mxu0 0.0
    %235 = vmatpush1.msra.mxu0 0.0
    %236 = vmatprep.subr.mxu0 0.0
    %237 = vmatpush1.msra.mxu0 0.0
    %238 = vmatprep.subr.mxu0 0.0
    %239 = vmatpush1.msra.mxu0 0.0
    %240 = vmatprep.subr.mxu0 0.0
    %241 = vmatpush1.msra.mxu0 0.0
    %242 = vmatprep.subr.mxu0 0.0
    %243 = vmatpush1.msra.mxu0 0.0
    %244 = vmatprep.subr.mxu0 0.0
    %245 = vmatpush1.msra.mxu0 0.0
    %246 = vmatprep.mubr.f32.mxu0 0.0
    %247 = vmatmul.mubr.f32.gmra.mrb[0].mxu0 %v156
    %v248 = vpop.f32.mrb[0].mxu0
    %v249 = vadd.f32 %v180, %v248
    %v250 = vpop.f32.mrb[0].mxu0
    %251 = vdwg.mxu0
    %v252 = vxor.u32 %v249, 2147483648
    %v253 = vmul.f32 %v252, 1.442695
    %v254 = vpow.pop %v253
    %v255 = vadd.f32 %v254, 1.0
    %v256 = vrcp.pop %v255
    %v257 = vmul.f32 1.0, %v256
    %v258 = vmul.f32 %v249, %v257
    %v259 = vld [vmem:[#allocation7] sm:$0xff]
    %v260 = vld [vmem:[#allocation7 + $0x8] sm:$0xff]
    %v261 = vld [vmem:[#allocation7 + $0x10] sm:$0xff]
    %v262 = vld [vmem:[#allocation7 + $0x18] sm:$0xff]
    %v263 = vld [vmem:[#allocation7 + $0x20] sm:$0xff]
    %v264 = vld [vmem:[#allocation7 + $0x28] sm:$0xff]
    %v265 = vld [vmem:[#allocation7 + $0x30] sm:$0xff]
    %v266 = vld [vmem:[#allocation7 + $0x38] sm:$0xff]
    %v267 = vld [vmem:[#allocation7 + $0x40] sm:$0xff]
    %v268 = vld [vmem:[#allocation7 + $0x48] sm:$0xff]
    %v269 = vld [vmem:[#allocation7 + $0x50] sm:$0xff]
    %v270 = vld [vmem:[#allocation7 + $0x58] sm:$0xff]
    %v271 = vld [vmem:[#allocation7 + $0x60] sm:$0xff]
    %v272 = vld [vmem:[#allocation7 + $0x68] sm:$0xff]
    %v273 = vld [vmem:[#allocation7 + $0x70] sm:$0xff]
    %v274 = vld [vmem:[#allocation7 + $0x78] sm:$0xff]
    %v275 = vld [vmem:[%s5] sm:$0x1]
    %v277 = vlaneseq
    %v278 = vshrl.u32 %v277, 7
    %v279 = vsub.s32 0, %v278
    %v280 = vrot.slane %v275, %v279
    %282 = vmatprep.subr.mxu0 0.0
    %283 = vmatpush1.msra.mxu0 %v259
    %284 = vmatprep.subr.mxu0 0.0
    %285 = vmatpush1.msra.mxu0 %v260
    %286 = vmatprep.subr.mxu0 0.0
    %287 = vmatpush1.msra.mxu0 %v261
    %288 = vmatprep.subr.mxu0 0.0
    %289 = vmatpush1.msra.mxu0 %v262
    %290 = vmatprep.subr.mxu0 0.0
    %291 = vmatpush1.msra.mxu0 %v263
    %292 = vmatprep.subr.mxu0 0.0
    %293 = vmatpush1.msra.mxu0 %v264
    %294 = vmatprep.subr.mxu0 0.0
    %295 = vmatpush1.msra.mxu0 %v265
    %296 = vmatprep.subr.mxu0 0.0
    %297 = vmatpush1.msra.mxu0 %v266
    %298 = vmatprep.subr.mxu0 0.0
    %299 = vmatpush1.msra.mxu0 %v267
    %300 = vmatprep.subr.mxu0 0.0
    %301 = vmatpush1.msra.mxu0 %v268
    %302 = vmatprep.subr.mxu0 0.0
    %303 = vmatpush1.msra.mxu0 %v269
    %304 = vmatprep.subr.mxu0 0.0
    %305 = vmatpush1.msra.mxu0 %v270
    %306 = vmatprep.subr.mxu0 0.0
    %307 = vmatpush1.msra.mxu0 %v271
    %308 = vmatprep.subr.mxu0 0.0
    %309 = vmatpush1.msra.mxu0 %v272
    %310 = vmatprep.subr.mxu0 0.0
    %311 = vmatpush1.msra.mxu0 %v273
    %312 = vmatprep.subr.mxu0 0.0
    %313 = vmatpush1.msra.mxu0 %v274
    %314 = vmatprep.subr.mxu0 0.0
    %315 = vmatpush1.msra.mxu0 0.0
    %316 = vmatprep.subr.mxu0 0.0
    %317 = vmatpush1.msra.mxu0 0.0
    %318 = vmatprep.subr.mxu0 0.0
    %319 = vmatpush1.msra.mxu0 0.0
    %320 = vmatprep.subr.mxu0 0.0
    %321 = vmatpush1.msra.mxu0 0.0
    %322 = vmatprep.subr.mxu0 0.0
    %323 = vmatpush1.msra.mxu0 0.0
    %324 = vmatprep.subr.mxu0 0.0
    %325 = vmatpush1.msra.mxu0 0.0
    %326 = vmatprep.subr.mxu0 0.0
    %327 = vmatpush1.msra.mxu0 0.0
    %328 = vmatprep.subr.mxu0 0.0
    %329 = vmatpush1.msra.mxu0 0.0
    %330 = vmatprep.subr.mxu0 0.0
    %331 = vmatpush1.msra.mxu0 0.0
    %332 = vmatprep.subr.mxu0 0.0
    %333 = vmatpush1.msra.mxu0 0.0
    %334 = vmatprep.subr.mxu0 0.0
    %335 = vmatpush1.msra.mxu0 0.0
    %336 = vmatprep.subr.mxu0 0.0
    %337 = vmatpush1.msra.mxu0 0.0
    %338 = vmatprep.subr.mxu0 0.0
    %339 = vmatpush1.msra.mxu0 0.0
    %340 = vmatprep.subr.mxu0 0.0
    %341 = vmatpush1.msra.mxu0 0.0
    %342 = vmatprep.subr.mxu0 0.0
    %343 = vmatpush1.msra.mxu0 0.0
    %344 = vmatprep.subr.mxu0 0.0
    %345 = vmatpush1.msra.mxu0 0.0
    %346 = vmatprep.mubr.f32.mxu0 0.0
    %347 = vmatmul.mubr.f32.gmra.mrb[0].mxu0 %v258
    %v348 = vpop.f32.mrb[0].mxu0
    %v349 = vadd.f32 %v280, %v348
    %v350 = vpop.f32.mrb[0].mxu0
    %351 = vdwg.mxu0
    %v352 = vxor.u32 %v349, 2147483648
    %v353 = vmul.f32 %v352, 1.442695
    %v354 = vpow.pop %v353
    %v355 = vadd.f32 %v354, 1.0
    %v356 = vrcp.pop %v355
    %v357 = vmul.f32 1.0, %v356
    %v358 = vmul.f32 %v349, %v357
    %359 = vst [vmem:[#allocation8] sm:$0xff] %v358
    // Predicated region
    $region38: #{tpu_custom_call.1} parent=1 // pred_check
      _
    $region39: #{tpu_custom_call.1} parent=1 // pred_check_branch
      %361 = sbr.rel (0) target = $region41
    $region40: #{tpu_custom_call.1} parent=1 // pred_region
      %s363 = ssub.s32 128, 128
      %364 = vsyncadd [#allocation4], %s363
      %s366 = sshll.u32 [#allocation8], 4
      %s367 = int_to_ptr.vmem [resolvable:$true] %s366
      %369 = dma.vmem_to_hbm [thread:$0]  %s367, 128, %s6, [#allocation4]
    $region41: #{tpu_custom_call.1} parent=1 // pred_fallthru
      _
    // Predicated region
    $region42: #{tpu_custom_call.1} parent=1 // pred_check
      _
    $region43: #{tpu_custom_call.1} parent=1 // pred_check_branch
      %371 = sbr.rel (0) target = $region45
    $region44: #{tpu_custom_call.1} parent=1 // pred_region
      %372 = dma.done [#allocation4], 128
    $region45: #{tpu_custom_call.1} parent=1 // pred_fallthru
      _
    %373 = vsyncpa [#allocation3], 1
    %374 = vsyncpa [#allocation6], 1
    %375 = vsyncpa [#allocation4], 1

</llo_original>
